<compile_context>
chip_gen: v6e
topology: v6e:2x2x1
jax: 0.10.0
libtpu: 0.0.40
codegen_flags: <defaults>
</compile_context>

<pallas_src>
import functools

import jax
import jax.numpy as jnp
from jax.experimental import pallas as pl
from jax.experimental.pallas import tpu as pltpu

EPS = 1e-5


def _round_up(n, m):
    return ((n + m - 1) // m) * m


def _vmem_budget_bytes():
    """Generation-aware VMEM budget (~75% of per-core VMEM, >= 16 MiB)."""
    try:
        cap = int(pltpu.get_tpu_info().vmem_capacity_bytes)
    except Exception:
        cap = 64 * 2**20          # conservative fallback (v7x-sized VMEM)
    return max(16 * 2**20, cap * 3 // 4)


# --------------------------------------------------------------------------
# Kernels
# --------------------------------------------------------------------------
def _resblock_kernel_resident(x_ref, w1_ref, b1_ref, w2_ref, b2_ref, o_ref):
    """One (TM, Fp) row tile; both folded (Fp, Fp) weights VMEM-resident."""
    x = x_ref[...]
    h = jnp.dot(x.astype(w1_ref.dtype), w1_ref[...],
                preferred_element_type=jnp.float32) + b1_ref[...]
    h = jnp.maximum(h, 0.0)
    h = jnp.dot(h.astype(w2_ref.dtype), w2_ref[...],
                preferred_element_type=jnp.float32) + b2_ref[...]
    # residual add in f32, single cast at the final store
    o_ref[...] = (x.astype(jnp.float32) + h).astype(o_ref.dtype)


def _resblock_kernel_ktiled(x_ref, w1_ref, b1_ref, w2_ref, b2_ref, o_ref,
                            acc_ref):
    """K-tiled fallback: grid = (row tiles, feature blocks of the hidden dim).

    Per k-step: h_k = relu(x @ W1[:, k-block] + b1[k-block]);
                acc += h_k @ W2[k-block, :]
    acc is initialized with x + b2 at k == 0 and stored at the last k.
    """
    k = pl.program_id(1)
    x = x_ref[...]

    @pl.when(k == 0)
    def _():
        acc_ref[...] = x.astype(jnp.float32) + b2_ref[...]

    h = jnp.dot(x.astype(w1_ref.dtype), w1_ref[...],
                preferred_element_type=jnp.float32) + b1_ref[...]
    h = jnp.maximum(h, 0.0)
    acc_ref[...] += jnp.dot(h.astype(w2_ref.dtype), w2_ref[...],
                            preferred_element_type=jnp.float32)

    @pl.when(k == pl.num_programs(1) - 1)
    def _():
        o_ref[...] = acc_ref[...].astype(o_ref.dtype)


# --------------------------------------------------------------------------
# Host-side, run ONCE at model-load time (hoisted out of the per-call path)
# --------------------------------------------------------------------------
def prepare_params(p, *, weight_dtype=jnp.bfloat16):
    """Fold eval-mode BN into the Linears, pad lane-dense, cast weights."""
    def fold(w, b, gamma, beta, mean, var):
        s = gamma * jax.lax.rsqrt(var + EPS)        # (1, F) output-feature scale
        return w * s, (b - mean) * s + beta

    w1, b1 = fold(p["w1"], p["b1"], p["g1"], p["be1"], p["m1"], p["v1"])
    w2, b2 = fold(p["w2"], p["b2"], p["g2"], p["be2"], p["m2"], p["v2"])

    F = w1.shape[0]
    Fp = _round_up(F, 128)
    if Fp != F:
        pad = Fp - F                                # zero padding is exact
        w1 = jnp.pad(w1, ((0, pad), (0, pad)))
        w2 = jnp.pad(w2, ((0, pad), (0, pad)))
        b1 = jnp.pad(b1, ((0, 0), (0, pad)))
        b2 = jnp.pad(b2, ((0, 0), (0, pad)))

    return dict(
        w1=w1.astype(weight_dtype), w2=w2.astype(weight_dtype),
        b1=b1.astype(jnp.float32), b2=b2.astype(jnp.float32),
    )


# --------------------------------------------------------------------------
# Forward
# --------------------------------------------------------------------------
@functools.partial(jax.jit,
                   static_argnames=("block_rows", "ktile", "force_path"))
def residual_block(x, w1, b1, w2, b2, *, block_rows=512, ktile=512,
                   force_path=None):
    """x: (N, F). w1/w2: (Fp, Fp) folded+padded weights, b1/b2: (1, Fp) f32."""
    N, F = x.shape
    Fp = w1.shape[0]
    out_dtype = x.dtype
    wbytes = jnp.dtype(w1.dtype).itemsize
    xbytes = jnp.dtype(x.dtype).itemsize

    budget = _vmem_budget_bytes()

    # -- resident-path VMEM accounting --------------------------------------
    # weights + biases, single-buffered (pl.Buffered(1))
    resident = 2 * Fp * Fp * wbytes + 2 * Fp * 4
    # x/out tiles (double-buffered) + f32 in-kernel intermediates (h, 2nd
    # matmul accumulator, residual) per row
    per_row_res = 2 * 2 * Fp * xbytes + 3 * Fp * 4

    n8 = _round_up(N, 8)
    min_rows = min(256, n8)        # want at least a 256-row tile when N allows
    fits_resident = resident + min_rows * per_row_res <= budget
    use_resident = (force_path == "resident") or (
        force_path is None and fits_resident)

    if use_resident:
        # ------------------------- resident-weight path --------------------
        tm_cap = max(8, (budget - resident) // per_row_res)
        tm = min(block_rows, tm_cap, n8)
        if n8 >= 16:
            # >= 2 grid steps so both v7x TensorCores get work
            tm = min(tm, _round_up((n8 + 1) // 2, 8))
        tm = max(8, (tm // 8) * 8)
        Np = _round_up(N, tm)

        padded = (Np, Fp) != (N, F)
        xp = jnp.pad(x, ((0, Np - N), (0, Fp - F))) if padded else x

        row_spec = pl.BlockSpec((tm, Fp), lambda i: (i, 0))

        def resident_spec(shape):
            # constant index_map -> DMA'd once; single buffer saves VMEM
            return pl.BlockSpec(shape, lambda i: (0, 0),
                                pipeline_mode=pl.Buffered(1))

        cost = pl.CostEstimate(
            flops=2 * 2 * Np * Fp * Fp,
            transcendentals=0,
            bytes_accessed=2 * Np * Fp * xbytes + 2 * Fp * Fp * wbytes
                           + 2 * Fp * 4,
        )

        out = pl.pallas_call(
            _resblock_kernel_resident,
            out_shape=jax.ShapeDtypeStruct((Np, Fp), out_dtype),
            grid=(Np // tm,),
            in_specs=[
                row_spec,                         # x tile (pipelined)
                resident_spec((Fp, Fp)),          # W1' (resident, 1 buffer)
                resident_spec((1, Fp)),           # b1'
                resident_spec((Fp, Fp)),          # W2' (resident, 1 buffer)
                resident_spec((1, Fp)),           # b2'
            ],
            out_specs=row_spec,
            input_output_aliases={0: 0} if padded else {},
            compiler_params=pltpu.CompilerParams(
                dimension_semantics=("parallel",),
                vmem_limit_bytes=budget),
            cost_estimate=cost,
        )(xp, w1, b1, w2, b2)
        return out[:N, :F]

    # ----------------------------- K-tiled path ----------------------------
    tk = min(ktile, Fp)
    tk = max(128, (tk // 128) * 128)
    while Fp % tk:                 # Fp is a multiple of 128 -> terminates
        tk -= 128
    nk = Fp // tk

    # streamed weight blocks (double-buffered) + biases
    streamed = 2 * 2 * Fp * tk * wbytes + (2 * tk + Fp) * 4
    # x/out tiles (double-buffered) + f32 acc scratch + f32 intermediates
    per_row_kt = 2 * 2 * Fp * xbytes + Fp * 4 + (tk + Fp) * 4

    tm_cap = max(8, (budget - streamed) // per_row_kt)
    tm = min(block_rows, tm_cap, n8)
    if n8 >= 16:
        tm = min(tm, _round_up((n8 + 1) // 2, 8))
    tm = max(8, (tm // 8) * 8)
    Np = _round_up(N, tm)

    padded = (Np, Fp) != (N, F)
    xp = jnp.pad(x, ((0, Np - N), (0, Fp - F))) if padded else x

    cost = pl.CostEstimate(
        flops=2 * 2 * Np * Fp * Fp,
        transcendentals=0,
        bytes_accessed=2 * Np * Fp * xbytes
                       + (Np // tm) * 2 * Fp * Fp * wbytes + 2 * Fp * 4,
    )

    out = pl.pallas_call(
        _resblock_kernel_ktiled,
        out_shape=jax.ShapeDtypeStruct((Np, Fp), out_dtype),
        grid=(Np // tm, nk),
        in_specs=[
            pl.BlockSpec((tm, Fp), lambda i, k: (i, 0)),     # x (const over k)
            pl.BlockSpec((Fp, tk), lambda i, k: (0, k)),     # W1' column block
            pl.BlockSpec((1, tk), lambda i, k: (0, k)),      # b1' block
            pl.BlockSpec((tk, Fp), lambda i, k: (k, 0)),     # W2' row block
            pl.BlockSpec((1, Fp), lambda i, k: (0, 0),
                         pipeline_mode=pl.Buffered(1)),      # b2' (resident)
        ],
        out_specs=pl.BlockSpec((tm, Fp), lambda i, k: (i, 0)),
        scratch_shapes=[pltpu.VMEM((tm, Fp), jnp.float32)],  # f32 accumulator
        input_output_aliases={0: 0} if padded else {},
        compiler_params=pltpu.CompilerParams(
            dimension_semantics=("parallel", "arbitrary"),
            vmem_limit_bytes=budget),
        cost_estimate=cost,
    )(xp, w1, b1, w2, b2)
    return out[:N, :F]


# --------------------------------------------------------------------------
# Pure-JAX reference (eval-mode forward, unfolded BN) and param init
# --------------------------------------------------------------------------
def residual_block_ref(x, p):
    h = x @ p["w1"] + p["b1"]
    h = (h - p["m1"]) / jnp.sqrt(p["v1"] + EPS) * p["g1"] + p["be1"]
    h = jnp.maximum(h, 0.0)
    h = h @ p["w2"] + p["b2"]
    h = (h - p["m2"]) / jnp.sqrt(p["v2"] + EPS) * p["g2"] + p["be2"]
    return x + h


def init_params(key, F):
    """nn.Linear-style init; non-trivial BN stats to exercise the folding."""
    keys = jax.random.split(key, 12)
    (kw1, kb1, kg1, kbe1, km1, kv1, kw2, kb2, kg2, kbe2, km2, kv2) = keys
    bound = 1.0 / float(F) ** 0.5

    def u(k, lo, hi, shape=(1, F)):
        return jax.random.uniform(k, shape, jnp.float32, lo, hi)

    return dict(
        # Linear weights stored already transposed: y = x @ w + b
        w1=u(kw1, -bound, bound, (F, F)), b1=u(kb1, -bound, bound),
        g1=u(kg1, 0.5, 1.5), be1=u(kbe1, -0.1, 0.1),
        m1=u(km1, -0.1, 0.1), v1=u(kv1, 0.5, 1.5),
        w2=u(kw2, -bound, bound, (F, F)), b2=u(kb2, -bound, bound),
        g2=u(kg2, 0.5, 1.5), be2=u(kbe2, -0.1, 0.1),
        m2=u(km2, -0.1, 0.1), v2=u(kv2, 0.5, 1.5),
    )


if __name__ == "__main__":
    key = jax.random.PRNGKey(0)
    kx, kp, kx2, kp2 = jax.random.split(key, 4)

    # ---- 1) small demo, bf16 weights (default fast path, resident weights) --
    N, F = 16, 32
    x = jax.random.normal(kx, (N, F), jnp.float32)
    params = init_params(kp, F)
    prepped = prepare_params(params)                 # fold/pad/cast once
    out = residual_block(x, prepped["w1"], prepped["b1"],
                         prepped["w2"], prepped["b2"])
    out = jax.block_until_ready(out)
    ref = residual_block_ref(x, params)
    assert out.shape == (N, F) and out.dtype == jnp.float32
    assert jnp.allclose(out, ref, atol=1e-1, rtol=1e-1), \
        "bf16 resident-path mismatch vs reference"

    # ---- 2) f32 weights: tight numerical check of the folded math ----------
    prepped32 = prepare_params(params, weight_dtype=jnp.float32)
    out32 = jax.block_until_ready(
        residual_block(x, prepped32["w1"], prepped32["b1"],
                       prepped32["w2"], prepped32["b2"]))
    assert jnp.allclose(out32, ref, atol=1e-4, rtol=1e-4), \
        "f32 resident-path mismatch vs reference"

    # ---- 3) exercise the K-tiled fallback path (forced, small shapes) -------
    N2, F2 = 64, 256
    x2 = jax.random.normal(kx2, (N2, F2), jnp.float32)
    params2 = init_params(kp2, F2)
    prepped2 = prepare_params(params2)
    out_kt = jax.block_until_ready(
        residual_block(x2, prepped2["w1"], prepped2["b1"],
                       prepped2["w2"], prepped2["b2"],
                       ktile=128, force_path="ktiled"))
    ref2 = residual_block_ref(x2, params2)
    assert out_kt.shape == (N2, F2)
    assert jnp.allclose(out_kt, ref2, atol=1e-1, rtol=1e-1), \
        "bf16 K-tiled-path mismatch vs reference"

    print("KERNEL_OK")
</pallas_src>

<mosaic_0001>
module attributes {stable_mosaic.version = 11 : i64} {
  func.func @_resblock_kernel_resident(%arg0: i32, %arg1: memref<8x128xf32, #tpu.memory_space<vmem>>, %arg2: memref<128x128xbf16, #tpu.memory_space<vmem>>, %arg3: memref<1x128xf32, #tpu.memory_space<vmem>>, %arg4: memref<128x128xbf16, #tpu.memory_space<vmem>>, %arg5: memref<1x128xf32, #tpu.memory_space<vmem>>, %arg6: memref<8x128xf32, #tpu.memory_space<vmem>>) attributes {dimension_semantics = [#tpu.dimension_semantics<parallel>], iteration_bounds = array<i64: 2>, scalar_prefetch = 0 : i64, scratch_operands = 0 : i64, tpu.core_type = #tpu.core_type<tc>, window_params = [{transform_indices = @transform_0, window_bounds = array<i64: 8, 128>}, {pipeline_mode = #tpu.pipeline_mode<synchronous>, transform_indices = @transform_1, window_bounds = array<i64: 128, 128>}, {pipeline_mode = #tpu.pipeline_mode<synchronous>, transform_indices = @transform_2, window_bounds = array<i64: 1, 128>}, {pipeline_mode = #tpu.pipeline_mode<synchronous>, transform_indices = @transform_3, window_bounds = array<i64: 128, 128>}, {pipeline_mode = #tpu.pipeline_mode<synchronous>, transform_indices = @transform_4, window_bounds = array<i64: 1, 128>}, {transform_indices = @transform_5, window_bounds = array<i64: 8, 128>}]} {
    %c0 = arith.constant 0 : index
    %c0_0 = arith.constant 0 : index
    %0 = vector.load %arg1[%c0, %c0_0] : memref<8x128xf32, #tpu.memory_space<vmem>>, vector<8x128xf32>
    %1 = arith.truncf %0 : vector<8x128xf32> to vector<8x128xbf16>
    %c0_1 = arith.constant 0 : index
    %c0_2 = arith.constant 0 : index
    %2 = vector.load %arg2[%c0_1, %c0_2] : memref<128x128xbf16, #tpu.memory_space<vmem>>, vector<128x128xbf16>
    %cst = arith.constant dense<0.000000e+00> : vector<8x128xf32>
    %3 = tpu.matmul %1, %2, %cst {dimension_numbers = #tpu.dot_dimension_numbers<[1], [0], [0], [1], [0, 0, 1, 1], [], []>} : vector<8x128xbf16>, vector<128x128xbf16>, vector<8x128xf32> -> vector<8x128xf32>
    %c0_3 = arith.constant 0 : index
    %c0_4 = arith.constant 0 : index
    %4 = vector.load %arg3[%c0_3, %c0_4] : memref<1x128xf32, #tpu.memory_space<vmem>>, vector<1x128xf32>
    %5 = vector.broadcast %4 : vector<1x128xf32> to vector<8x128xf32>
    %6 = arith.addf %3, %5 : vector<8x128xf32>
    %cst_5 = arith.constant 0.000000e+00 : f32
    %7 = vector.broadcast %cst_5 : f32 to vector<8x128xf32>
    %8 = arith.maximumf %6, %7 : vector<8x128xf32>
    %9 = arith.truncf %8 : vector<8x128xf32> to vector<8x128xbf16>
    %c0_6 = arith.constant 0 : index
    %c0_7 = arith.constant 0 : index
    %10 = vector.load %arg4[%c0_6, %c0_7] : memref<128x128xbf16, #tpu.memory_space<vmem>>, vector<128x128xbf16>
    %cst_8 = arith.constant dense<0.000000e+00> : vector<8x128xf32>
    %11 = tpu.matmul %9, %10, %cst_8 {dimension_numbers = #tpu.dot_dimension_numbers<[1], [0], [0], [1], [0, 0, 1, 1], [], []>} : vector<8x128xbf16>, vector<128x128xbf16>, vector<8x128xf32> -> vector<8x128xf32>
    %c0_9 = arith.constant 0 : index
    %c0_10 = arith.constant 0 : index
    %12 = vector.load %arg5[%c0_9, %c0_10] : memref<1x128xf32, #tpu.memory_space<vmem>>, vector<1x128xf32>
    %13 = vector.broadcast %12 : vector<1x128xf32> to vector<8x128xf32>
    %14 = arith.addf %11, %13 : vector<8x128xf32>
    %15 = arith.addf %0, %14 : vector<8x128xf32>
    %c0_11 = arith.constant 0 : index
    %c0_12 = arith.constant 0 : index
    %16 = vector.load %arg6[%c0_11, %c0_12] : memref<8x128xf32, #tpu.memory_space<vmem>>, vector<8x128xf32>
    tpu.vector_store %arg6[%c0_11, %c0_12], %15 {strides = array<i32>} : memref<8x128xf32, #tpu.memory_space<vmem>>, vector<8x128xf32>,
    return
  }
  func.func @transform_0(%arg0: i32) -> (i32, i32) {
    %c0_i32 = arith.constant 0 : i32
    %c0_i32_0 = arith.constant 0 : i32
    return %arg0, %c0_i32 : i32, i32
  }
  func.func @transform_1(%arg0: i32) -> (i32, i32) {
    %c0_i32 = arith.constant 0 : i32
    %c0_i32_0 = arith.constant 0 : i32
    %c0_i32_1 = arith.constant 0 : i32
    return %c0_i32, %c0_i32_0 : i32, i32
  }
  func.func @transform_2(%arg0: i32) -> (i32, i32) {
    %c0_i32 = arith.constant 0 : i32
    %c0_i32_0 = arith.constant 0 : i32
    %c0_i32_1 = arith.constant 0 : i32
    return %c0_i32, %c0_i32_0 : i32, i32
  }
  func.func @transform_3(%arg0: i32) -> (i32, i32) {
    %c0_i32 = arith.constant 0 : i32
    %c0_i32_0 = arith.constant 0 : i32
    %c0_i32_1 = arith.constant 0 : i32
    return %c0_i32, %c0_i32_0 : i32, i32
  }
  func.func @transform_4(%arg0: i32) -> (i32, i32) {
    %c0_i32 = arith.constant 0 : i32
    %c0_i32_0 = arith.constant 0 : i32
    %c0_i32_1 = arith.constant 0 : i32
    return %c0_i32, %c0_i32_0 : i32, i32
  }
  func.func @transform_5(%arg0: i32) -> (i32, i32) {
    %c0_i32 = arith.constant 0 : i32
    %c0_i32_0 = arith.constant 0 : i32
    return %arg0, %c0_i32 : i32, i32
  }
}

</mosaic_0001>

<llo_original>
// kernel: residual_block.1
$region0: #{residual_block.1}
  #allocation0 [shape = 'u32[]', space=smem, size = 0x4, offset = 0x4, fixed_abs, tag = 'smem constant byte address 0x4 - core index']
  #allocation1 [shape = 'u32[144,128]{1,0:T(1,128)}', space=vmem, size = 0x12000, scoped, tag = 'internal scratch']
  %s0 = inlined_call_operand.vmem [shape: f32[16,128], index: 0, kind: input, shape index: {}, may-alias: {0,5}]
  %s1 = inlined_call_operand.hbm [shape: bf16[128,128], index: 1, kind: input, shape index: {}]
  %s2 = inlined_call_operand.vmem [shape: f32[1,128], index: 2, kind: input, shape index: {}]
  %s3 = inlined_call_operand.hbm [shape: bf16[128,128], index: 3, kind: input, shape index: {}]
  %s4 = inlined_call_operand.vmem [shape: f32[1,128], index: 4, kind: input, shape index: {}]
  %s5 = inlined_call_operand.vmem [shape: f32[16,128], index: 5, kind: output, shape index: {}, may-alias: {0,5}]
  %s6 = sld [smem:[#allocation0]]
  $region61: #{residual_block.1} parent=0
    _
  %s8 = ssub.s32 1, %s6
  %s9 = scalar_select 0, %s8, %s6
  $region1: #{residual_block.1} parent=0
    #allocation2 [shape = 'u8[32768]{0}', space=vmem, size = 0x8000, scoped, tag = 'input window, operand 1, single buffered']
    #allocation3 [shape = 's32[2]{0}', space=sflag, size = 0x8, scoped, tag = 'scoped memory for residual_block.1']
    #allocation4 [shape = 'u8[32768]{0}', space=vmem, size = 0x8000, scoped, tag = 'input window, operand 3, single buffered']
    #allocation5 [shape = 's32[1]{0}', space=sflag, size = 0x4, scoped, tag = 'scoped memory for residual_block.1']
    %10 = vsyncpa [#allocation3], 0
    %11 = vsyncpa [#allocation5], 0
    loop: start=0, step=1, limit=4
    $region2: #{residual_block.1} parent=1 // loop_pre_header
      _
    $region3: #{residual_block.1} parent=1 // loop_header
      %s13 = sphi 0, %s17
      %p14 = scmp.ge.s32.totalorder %s13, 4
      %s23 = sphi 0, %s25
      %s26 = sphi 0, %s23
      %s27 = sphi 0, %s26
      %s43 = sphi 0, %s27
      %s47 = sphi 0, %s47
      %s49 = sphi 0, %s47
      %s50 = sphi 0, %s49
      %s64 = sphi 0, %s50
      %s68 = sphi 0, %s68
      %s70 = sphi 0, %s68
      %s71 = sphi 0, %s70
      %s85 = sphi 0, %s71
      %s89 = sphi 0, %s89
      %s91 = sphi 0, %s89
      %s92 = sphi 0, %s91
      %s106 = sphi 0, %s92
      %s110 = sphi 0, %s110
      %s112 = sphi 0, %s110
      %s113 = sphi 0, %s112
      %s127 = sphi 0, %s113
      %s133 = sphi 0, %s135
      %s136 = sphi 0, %s133
      %s137 = sphi 0, %s136
      %s153 = sphi 0, %s137
    $region4: #{residual_block.1} parent=1 // loop_header_branch
      %16 = sbr.rel (%p14) target = $region8
    $region5: #{residual_block.1} parent=1 // loop_body
      %s18 = ssub.s32 %s13, 1
      %s19 = ssub.s32 %s13, 2
      %s20 = sadd.s32 %s13, 1
      %s21 = ssub.s32 %s13, %s20
      %p22 = scmp.eq.s32.totalorder %s21, 0
      %s24 = sadd.s32 %s23, 1
      %s25 = scalar_select %p22, %s23, %s24
      %p28 = pneg %p22
      %p29 = scmp.eq.s32.totalorder %s13, 1
      %p30 = por %p28, %p29
      %p31 = scmp.ne.s32.totalorder %s23, %s26
      %p32 = scmp.eq.s32.totalorder %s13, 0
      %p33 = por %p31, %p32
      %p34 = scmp.ne.s32.totalorder %s23, %s26
      %p35 = scmp.eq.s32.totalorder %s18, 1
      %p36 = por %p34, %p35
      %p37 = scmp.ne.s32.totalorder %s26, %s27
      %p38 = scmp.eq.s32.totalorder %s18, 0
      %p39 = por %p37, %p38
      %p40 = scmp.ne.s32.totalorder %s26, %s27
      %p41 = scmp.eq.s32.totalorder %s19, 1
      %p42 = por %p40, %p41
      %p44 = scmp.ne.s32.totalorder %s27, %s43
      %p45 = scmp.eq.s32.totalorder %s19, 0
      %p46 = por %p44, %p45
      %s48 = sadd.s32 %s47, 1
      %p51 = scmp.eq.s32.totalorder %s13, 1
      %p52 = scmp.ne.s32.totalorder %s47, %s49
      %p53 = scmp.eq.s32.totalorder %s13, 0
      %p54 = por %p52, %p53
      %p55 = scmp.ne.s32.totalorder %s47, %s49
      %p56 = scmp.eq.s32.totalorder %s18, 1
      %p57 = por %p55, %p56
      %p58 = scmp.ne.s32.totalorder %s49, %s50
      %p59 = scmp.eq.s32.totalorder %s18, 0
      %p60 = por %p58, %p59
      %p61 = scmp.ne.s32.totalorder %s49, %s50
      %p62 = scmp.eq.s32.totalorder %s19, 1
      %p63 = por %p61, %p62
      %p65 = scmp.ne.s32.totalorder %s50, %s64
      %p66 = scmp.eq.s32.totalorder %s19, 0
      %p67 = por %p65, %p66
      %s69 = sadd.s32 %s68, 1
      %p72 = scmp.eq.s32.totalorder %s13, 1
      %p73 = scmp.ne.s32.totalorder %s68, %s70
      %p74 = scmp.eq.s32.totalorder %s13, 0
      %p75 = por %p73, %p74
      %p76 = scmp.ne.s32.totalorder %s68, %s70
      %p77 = scmp.eq.s32.totalorder %s18, 1
      %p78 = por %p76, %p77
      %p79 = scmp.ne.s32.totalorder %s70, %s71
      %p80 = scmp.eq.s32.totalorder %s18, 0
      %p81 = por %p79, %p80
      %p82 = scmp.ne.s32.totalorder %s70, %s71
      %p83 = scmp.eq.s32.totalorder %s19, 1
      %p84 = por %p82, %p83
      %p86 = scmp.ne.s32.totalorder %s71, %s85
      %p87 = scmp.eq.s32.totalorder %s19, 0
      %p88 = por %p86, %p87
      %s90 = sadd.s32 %s89, 1
      %p93 = scmp.eq.s32.totalorder %s13, 1
      %p94 = scmp.ne.s32.totalorder %s89, %s91
      %p95 = scmp.eq.s32.totalorder %s13, 0
      %p96 = por %p94, %p95
      %p97 = scmp.ne.s32.totalorder %s89, %s91
      %p98 = scmp.eq.s32.totalorder %s18, 1
      %p99 = por %p97, %p98
      %p100 = scmp.ne.s32.totalorder %s91, %s92
      %p101 = scmp.eq.s32.totalorder %s18, 0
      %p102 = por %p100, %p101
      %p103 = scmp.ne.s32.totalorder %s91, %s92
      %p104 = scmp.eq.s32.totalorder %s19, 1
      %p105 = por %p103, %p104
      %p107 = scmp.ne.s32.totalorder %s92, %s106
      %p108 = scmp.eq.s32.totalorder %s19, 0
      %p109 = por %p107, %p108
      %s111 = sadd.s32 %s110, 1
      %p114 = scmp.eq.s32.totalorder %s13, 1
      %p115 = scmp.ne.s32.totalorder %s110, %s112
      %p116 = scmp.eq.s32.totalorder %s13, 0
      %p117 = por %p115, %p116
      %p118 = scmp.ne.s32.totalorder %s110, %s112
      %p119 = scmp.eq.s32.totalorder %s18, 1
      %p120 = por %p118, %p119
      %p121 = scmp.ne.s32.totalorder %s112, %s113
      %p122 = scmp.eq.s32.totalorder %s18, 0
      %p123 = por %p121, %p122
      %p124 = scmp.ne.s32.totalorder %s112, %s113
      %p125 = scmp.eq.s32.totalorder %s19, 1
      %p126 = por %p124, %p125
      %p128 = scmp.ne.s32.totalorder %s113, %s127
      %p129 = scmp.eq.s32.totalorder %s19, 0
      %p130 = por %p128, %p129
      %s131 = ssub.s32 %s13, %s20
      %p132 = scmp.eq.s32.totalorder %s131, 0
      %s134 = sadd.s32 %s133, 1
      %s135 = scalar_select %p132, %s133, %s134
      %p138 = pneg %p132
      %p139 = scmp.eq.s32.totalorder %s13, 1
      %p140 = por %p138, %p139
      %p141 = scmp.ne.s32.totalorder %s133, %s136
      %p142 = scmp.eq.s32.totalorder %s13, 0
      %p143 = por %p141, %p142
      %p144 = scmp.ne.s32.totalorder %s133, %s136
      %p145 = scmp.eq.s32.totalorder %s18, 1
      %p146 = por %p144, %p145
      %p147 = scmp.ne.s32.totalorder %s136, %s137
      %p148 = scmp.eq.s32.totalorder %s18, 0
      %p149 = por %p147, %p148
      %p150 = scmp.ne.s32.totalorder %s136, %s137
      %p151 = scmp.eq.s32.totalorder %s19, 1
      %p152 = por %p150, %p151
      %p154 = scmp.ne.s32.totalorder %s137, %s153
      %p155 = scmp.eq.s32.totalorder %s19, 0
      %p156 = por %p154, %p155
      %p157 = scmp.le.s32.totalorder 1, %s13
      %p158 = scmp.lt.s32.totalorder %s13, 3
      %p159 = pnand %p157, %p158
      %p160 = pneg %p159
      // Predicated region
      $region9: #{residual_block.1} parent=5 // pred_check
        _
      $region10: #{residual_block.1} parent=5 // pred_check_branch
        %162 = sbr.rel (%p159) target = $region12
      $region11: #{residual_block.1} parent=5 // pred_region
        %s163 = ssub.s32 %s13, 1
        // Predicated region
        $region13: #{residual_block.1} parent=11 // pred_check
          %p164 = pneg %p60
        $region14: #{residual_block.1} parent=11 // pred_check_branch
          %166 = sbr.rel (%p164) target = $region16
        $region15: #{residual_block.1} parent=11 // pred_region
          %s168 = ssub.s32 1024, 1024
          %169 = vsyncadd [#allocation3], %s168
          %s170 = sshll.u32 [#allocation2], 4
          %s171 = int_to_ptr.vmem [resolvable:$true] %s170
          %176 = dma.hbm_to_vmem [thread:$0]  %s1, 1024, %s171, [#allocation3], 64, 64, 4
        $region16: #{residual_block.1} parent=11 // pred_fallthru
          _
        // Predicated region
        $region17: #{residual_block.1} parent=11 // pred_check
          %p177 = pneg %p81
        $region18: #{residual_block.1} parent=11 // pred_check_branch
          %179 = sbr.rel (%p177) target = $region20
        $region19: #{residual_block.1} parent=11 // pred_region
          _
        $region20: #{residual_block.1} parent=11 // pred_fallthru
          _
        // Predicated region
        $region21: #{residual_block.1} parent=11 // pred_check
          %p180 = pneg %p102
        $region22: #{residual_block.1} parent=11 // pred_check_branch
          %182 = sbr.rel (%p180) target = $region24
        $region23: #{residual_block.1} parent=11 // pred_region
          %s184 = ssub.s32 1024, 1024
          %185 = vsyncadd [#allocation5], %s184
          %s186 = sshll.u32 [#allocation4], 4
          %s187 = int_to_ptr.vmem [resolvable:$true] %s186
          %192 = dma.hbm_to_vmem [thread:$0]  %s3, 1024, %s187, [#allocation5], 64, 64, 4
        $region24: #{residual_block.1} parent=11 // pred_fallthru
          _
        // Predicated region
        $region25: #{residual_block.1} parent=11 // pred_check
          %p193 = pneg %p123
        $region26: #{residual_block.1} parent=11 // pred_check_branch
          %195 = sbr.rel (%p193) target = $region28
        $region27: #{residual_block.1} parent=11 // pred_region
          _
        $region28: #{residual_block.1} parent=11 // pred_fallthru
          _
      $region12: #{residual_block.1} parent=5 // pred_fallthru
        _
      %p196 = scmp.lt.s32.totalorder %s13, 2
      // Predicated region
      $region29: #{residual_block.1} parent=5 // pred_check
        %p197 = pneg %p196
      $region30: #{residual_block.1} parent=5 // pred_check_branch
        %199 = sbr.rel (%p197) target = $region32
      $region31: #{residual_block.1} parent=5 // pred_region
        // Predicated region
        $region33: #{residual_block.1} parent=31 // pred_check
          %p200 = pneg %p33
        $region34: #{residual_block.1} parent=31 // pred_check_branch
          %202 = sbr.rel (%p200) target = $region36
        $region35: #{residual_block.1} parent=31 // pred_region
          %p203 = scmp.lt.s32.totalorder %s13, 1
          %s204 = scalar_select %p203, %s13, 1
          %s205 = smul.addr %s204, 8
          %s206 = scalar_lea.vmem %s0, %s205
        $region36: #{residual_block.1} parent=31 // pred_fallthru
          _
      $region32: #{residual_block.1} parent=5 // pred_fallthru
        _
      %p207 = scmp.le.s32.totalorder 1, %s13
      %p208 = scmp.lt.s32.totalorder %s13, 3
      %p209 = pnand %p207, %p208
      %p210 = pneg %p209
      // Predicated region
      $region37: #{residual_block.1} parent=5 // pred_check
        _
      $region38: #{residual_block.1} parent=5 // pred_check_branch
        %212 = sbr.rel (%p209) target = $region40
      $region39: #{residual_block.1} parent=5 // pred_region
        %s213 = ssub.s32 %s13, 1
        // Predicated region
        $region41: #{residual_block.1} parent=39 // pred_check
          %p214 = pneg %p60
        $region42: #{residual_block.1} parent=39 // pred_check_branch
          %216 = sbr.rel (%p214) target = $region44
        $region43: #{residual_block.1} parent=39 // pred_region
          %217 = dma.done [#allocation3], 1024
        $region44: #{residual_block.1} parent=39 // pred_fallthru
          _
        // Predicated region
        $region45: #{residual_block.1} parent=39 // pred_check
          %p218 = pneg %p102
        $region46: #{residual_block.1} parent=39 // pred_check_branch
          %220 = sbr.rel (%p218) target = $region48
        $region47: #{residual_block.1} parent=39 // pred_region
          %221 = dma.done [#allocation5], 1024
        $region48: #{residual_block.1} parent=39 // pred_fallthru
          _
        %p222 = scmp.lt.s32.totalorder %s18, 1
        %s223 = scalar_select %p222, %s18, 1
        %s224 = smul.addr %s223, 8
        %s225 = scalar_lea.vmem %s0, %s224
        %p226 = pneg %p39
        %p227 = pneg %p36
        %p228 = pneg %p60
        %p229 = pneg %p57
        %p230 = pneg %p81
        %p231 = pneg %p78
        %p232 = pneg %p102
        %p233 = pneg %p99
        %p234 = pneg %p123
        %p235 = pneg %p120
        %p236 = pneg %p149
        %p237 = pneg %p146
        %p238 = scmp.lt.s32.totalorder %s18, 1
        %s239 = scalar_select %p238, %s18, 1
        %s240 = smul.addr %s239, 8
        %s241 = scalar_lea.vmem %s5, %s240
        %p242 = scmp.lt.s32.totalorder %s18, 1
        %s243 = scalar_select %p242, %s18, 1
        %s244 = smul.addr %s243, 8
        %s245 = scalar_lea.vmem %s0, %s244
        %p246 = scmp.lt.s32.totalorder %s18, 1
        %s247 = scalar_select %p246, %s18, 1
        %s248 = smul.addr %s247, 8
        %s249 = scalar_lea.vmem %s5, %s248
        %v251 = vld [vmem:[%s245] sm:$0xff]
        %v252 = vpack.c.bf16 %v251, %v251
        %v253 = vld [vmem:[#allocation2] sm:$0xf]
        %v254 = vld [vmem:[#allocation2 + $0x4] sm:$0xf]
        %v255 = vld [vmem:[#allocation2 + $0x8] sm:$0xf]
        %v256 = vld [vmem:[#allocation2 + $0xc] sm:$0xf]
        %v257 = vld [vmem:[#allocation2 + $0x10] sm:$0xf]
        %v258 = vld [vmem:[#allocation2 + $0x14] sm:$0xf]
        %v259 = vld [vmem:[#allocation2 + $0x18] sm:$0xf]
        %v260 = vld [vmem:[#allocation2 + $0x1c] sm:$0xf]
        %v261 = vld [vmem:[#allocation2 + $0x20] sm:$0xf]
        %v262 = vld [vmem:[#allocation2 + $0x24] sm:$0xf]
        %v263 = vld [vmem:[#allocation2 + $0x28] sm:$0xf]
        %v264 = vld [vmem:[#allocation2 + $0x2c] sm:$0xf]
        %v265 = vld [vmem:[#allocation2 + $0x30] sm:$0xf]
        %v266 = vld [vmem:[#allocation2 + $0x34] sm:$0xf]
        %v267 = vld [vmem:[#allocation2 + $0x38] sm:$0xf]
        %v268 = vld [vmem:[#allocation2 + $0x3c] sm:$0xf]
        %v269 = vld [vmem:[%s2] sm:$0x1]
        %v271 = vlaneseq
        %v272 = vshrl.u32 %v271, 7
        %v273 = vsub.s32 0, %v272
        %v274 = vrot.slane %v269, %v273
        %v292 = vunpack.c.l.b16 %v253
        %v293 = vunpack.c.l.b16 %v254
        %v294 = vunpack.c.l.b16 %v255
        %v295 = vunpack.c.l.b16 %v256
        %v296 = vunpack.c.l.b16 %v257
        %v297 = vunpack.c.l.b16 %v258
        %v298 = vunpack.c.l.b16 %v259
        %v299 = vunpack.c.l.b16 %v260
        %v300 = vunpack.c.l.b16 %v261
        %v301 = vunpack.c.l.b16 %v262
        %v302 = vunpack.c.l.b16 %v263
        %v303 = vunpack.c.l.b16 %v264
        %v304 = vunpack.c.l.b16 %v265
        %v305 = vunpack.c.l.b16 %v266
        %v306 = vunpack.c.l.b16 %v267
        %v307 = vunpack.c.l.b16 %v268
        %v308 = vpack.c.b16 %v293, %v292
        %v309 = vpack.c.b16 %v295, %v294
        %v310 = vpack.c.b16 %v297, %v296
        %v311 = vpack.c.b16 %v299, %v298
        %v312 = vpack.c.b16 %v301, %v300
        %v313 = vpack.c.b16 %v303, %v302
        %v314 = vpack.c.b16 %v305, %v304
        %v315 = vpack.c.b16 %v307, %v306
        %324 = vmatprep.subr.bf16.mxu0 0
        %325 = vmatpush1.bf16.msra.mxu0 %v315
        %326 = vmatprep.subr.bf16.mxu0 0
        %327 = vmatpush1.bf16.msra.mxu0 %v314
        %328 = vmatprep.subr.bf16.mxu0 0
        %329 = vmatpush1.bf16.msra.mxu0 %v313
        %330 = vmatprep.subr.bf16.mxu0 0
        %331 = vmatpush1.bf16.msra.mxu0 %v312
        %332 = vmatprep.subr.bf16.mxu0 0
        %333 = vmatpush1.bf16.msra.mxu0 %v311
        %334 = vmatprep.subr.bf16.mxu0 0
        %335 = vmatpush1.bf16.msra.mxu0 %v310
        %336 = vmatprep.subr.bf16.mxu0 0
        %337 = vmatpush1.bf16.msra.mxu0 %v309
        %338 = vmatprep.subr.bf16.mxu0 0
        %339 = vmatpush1.bf16.msra.mxu0 %v308
        %340 = vmatprep.subr.bf16.mxu0 0
        %341 = vmatpush2.bf16.msra.mxu0 0
        %342 = vmatprep.subr.bf16.mxu0 0
        %343 = vmatpush2.bf16.msra.mxu0 0
        %344 = vmatprep.subr.bf16.mxu0 0
        %345 = vmatpush2.bf16.msra.mxu0 0
        %346 = vmatprep.subr.bf16.mxu0 0
        %347 = vmatpush2.bf16.msra.mxu0 0
        %348 = vmatprep.subr.bf16.mxu0 0
        %349 = vmatpush2.bf16.msra.mxu0 0
        %350 = vmatprep.subr.bf16.mxu0 0
        %351 = vmatpush2.bf16.msra.mxu0 0
        %352 = vmatprep.subr.bf16.mxu0 0
        %353 = vmatpush2.bf16.msra.mxu0 0
        %354 = vmatprep.subr.bf16.mxu0 0
        %355 = vmatpush2.bf16.msra.mxu0 0
        %356 = vmatprep.mubr.bf16.mxu0 0
        %357 = vmatmul.mubr.bf16.gmra.mxu0 %v252
        %v358 = vpop.f32.mrf.mxu0
        %v359 = vadd.f32 %v274, %v358
        %v360 = vpop.f32.mrf.mxu0
        %v361 = vpop.f32.mrf.mxu0
        %v362 = vpop.f32.mrf.mxu0
        %363 = vdwg.mxu0
        %v364 = vmax.f32 %v359, 0.0
        %v365 = vpack.c.bf16 %v364, %v364
        %v366 = vld [vmem:[#allocation4] sm:$0xf]
        %v367 = vld [vmem:[#allocation4 + $0x4] sm:$0xf]
        %v368 = vld [vmem:[#allocation4 + $0x8] sm:$0xf]
        %v369 = vld [vmem:[#allocation4 + $0xc] sm:$0xf]
        %v370 = vld [vmem:[#allocation4 + $0x10] sm:$0xf]
        %v371 = vld [vmem:[#allocation4 + $0x14] sm:$0xf]
        %v372 = vld [vmem:[#allocation4 + $0x18] sm:$0xf]
        %v373 = vld [vmem:[#allocation4 + $0x1c] sm:$0xf]
        %v374 = vld [vmem:[#allocation4 + $0x20] sm:$0xf]
        %v375 = vld [vmem:[#allocation4 + $0x24] sm:$0xf]
        %v376 = vld [vmem:[#allocation4 + $0x28] sm:$0xf]
        %v377 = vld [vmem:[#allocation4 + $0x2c] sm:$0xf]
        %v378 = vld [vmem:[#allocation4 + $0x30] sm:$0xf]
        %v379 = vld [vmem:[#allocation4 + $0x34] sm:$0xf]
        %v380 = vld [vmem:[#allocation4 + $0x38] sm:$0xf]
        %v381 = vld [vmem:[#allocation4 + $0x3c] sm:$0xf]
        %v382 = vld [vmem:[%s4] sm:$0x1]
        %v384 = vlaneseq
        %v385 = vshrl.u32 %v384, 7
        %v386 = vsub.s32 0, %v385
        %v387 = vrot.slane %v382, %v386
        %v405 = vunpack.c.l.b16 %v366
        %v406 = vunpack.c.l.b16 %v367
        %v407 = vunpack.c.l.b16 %v368
        %v408 = vunpack.c.l.b16 %v369
        %v409 = vunpack.c.l.b16 %v370
        %v410 = vunpack.c.l.b16 %v371
        %v411 = vunpack.c.l.b16 %v372
        %v412 = vunpack.c.l.b16 %v373
        %v413 = vunpack.c.l.b16 %v374
        %v414 = vunpack.c.l.b16 %v375
        %v415 = vunpack.c.l.b16 %v376
        %v416 = vunpack.c.l.b16 %v377
        %v417 = vunpack.c.l.b16 %v378
        %v418 = vunpack.c.l.b16 %v379
        %v419 = vunpack.c.l.b16 %v380
        %v420 = vunpack.c.l.b16 %v381
        %v421 = vpack.c.b16 %v406, %v405
        %v422 = vpack.c.b16 %v408, %v407
        %v423 = vpack.c.b16 %v410, %v409
        %v424 = vpack.c.b16 %v412, %v411
        %v425 = vpack.c.b16 %v414, %v413
        %v426 = vpack.c.b16 %v416, %v415
        %v427 = vpack.c.b16 %v418, %v417
        %v428 = vpack.c.b16 %v420, %v419
        %437 = vmatprep.subr.bf16.mxu0 0
        %438 = vmatpush1.bf16.msra.mxu0 %v428
        %439 = vmatprep.subr.bf16.mxu0 0
        %440 = vmatpush1.bf16.msra.mxu0 %v427
        %441 = vmatprep.subr.bf16.mxu0 0
        %442 = vmatpush1.bf16.msra.mxu0 %v426
        %443 = vmatprep.subr.bf16.mxu0 0
        %444 = vmatpush1.bf16.msra.mxu0 %v425
        %445 = vmatprep.subr.bf16.mxu0 0
        %446 = vmatpush1.bf16.msra.mxu0 %v424
        %447 = vmatprep.subr.bf16.mxu0 0
        %448 = vmatpush1.bf16.msra.mxu0 %v423
        %449 = vmatprep.subr.bf16.mxu0 0
        %450 = vmatpush1.bf16.msra.mxu0 %v422
        %451 = vmatprep.subr.bf16.mxu0 0
        %452 = vmatpush1.bf16.msra.mxu0 %v421
        %453 = vmatprep.subr.bf16.mxu0 0
        %454 = vmatpush2.bf16.msra.mxu0 0
        %455 = vmatprep.subr.bf16.mxu0 0
        %456 = vmatpush2.bf16.msra.mxu0 0
        %457 = vmatprep.subr.bf16.mxu0 0
        %458 = vmatpush2.bf16.msra.mxu0 0
        %459 = vmatprep.subr.bf16.mxu0 0
        %460 = vmatpush2.bf16.msra.mxu0 0
        %461 = vmatprep.subr.bf16.mxu0 0
        %462 = vmatpush2.bf16.msra.mxu0 0
        %463 = vmatprep.subr.bf16.mxu0 0
        %464 = vmatpush2.bf16.msra.mxu0 0
        %465 = vmatprep.subr.bf16.mxu0 0
        %466 = vmatpush2.bf16.msra.mxu0 0
        %467 = vmatprep.subr.bf16.mxu0 0
        %468 = vmatpush2.bf16.msra.mxu0 0
        %469 = vmatprep.mubr.bf16.mxu0 0
        %470 = vmatmul.mubr.bf16.gmra.mxu0 %v365
        %v471 = vpop.f32.mrf.mxu0
        %v472 = vadd.f32 %v387, %v471
        %v473 = vpop.f32.mrf.mxu0
        %v474 = vpop.f32.mrf.mxu0
        %v475 = vpop.f32.mrf.mxu0
        %476 = vdwg.mxu0
        %v477 = vadd.f32 %v251, %v472
        %478 = vst [vmem:[%s249] sm:$0xff] %v477
        %p479 = scmp.lt.s32.totalorder %s18, 1
        %s480 = scalar_select %p479, %s18, 1
        %s481 = smul.addr %s480, 8
        %s482 = scalar_lea.vmem %s5, %s481
        // Predicated region
        $region49: #{residual_block.1} parent=39 // pred_check
          %p483 = pneg %p146
        $region50: #{residual_block.1} parent=39 // pred_check_branch
          %485 = sbr.rel (%p483) target = $region52
        $region51: #{residual_block.1} parent=39 // pred_region
          _
        $region52: #{residual_block.1} parent=39 // pred_fallthru
          _
      $region40: #{residual_block.1} parent=5 // pred_fallthru
        _
      %p486 = scmp.le.s32.totalorder 2, %s13
      // Predicated region
      $region53: #{residual_block.1} parent=5 // pred_check
        %p487 = pneg %p486
      $region54: #{residual_block.1} parent=5 // pred_check_branch
        %489 = sbr.rel (%p487) target = $region56
      $region55: #{residual_block.1} parent=5 // pred_region
        %s490 = ssub.s32 %s13, 2
        // Predicated region
        $region57: #{residual_block.1} parent=55 // pred_check
          %p491 = pneg %p152
        $region58: #{residual_block.1} parent=55 // pred_check_branch
          %493 = sbr.rel (%p491) target = $region60
        $region59: #{residual_block.1} parent=55 // pred_region
          %p494 = scmp.lt.s32.totalorder %s19, 1
          %s495 = scalar_select %p494, %s19, 1
          %s496 = smul.addr %s495, 8
          %s497 = scalar_lea.vmem %s5, %s496
        $region60: #{residual_block.1} parent=55 // pred_fallthru
          _
      $region56: #{residual_block.1} parent=5 // pred_fallthru
        _
    $region6: #{residual_block.1} parent=1 // loop_footer
      %s17 = sadd.s32 1, %s13
    $region7: #{residual_block.1} parent=1 // loop_footer_branch
      %12 = sbr.rel target = $region3
    $region8: #{residual_block.1} parent=1 // loop_exit
      _
    %498 = vsyncpa [#allocation3], 1
    %s499 = scalar_lea.sflag [#allocation3], 1
    %500 = vsyncpa %s499, 1
    %501 = vsyncpa [#allocation5], 1

</llo_original>
